<compile_context>
chip_gen: v5e
topology: v5e:2x2
jax: 0.10.0
libtpu: 0.0.40
codegen_flags: <defaults>
</compile_context>

<pallas_src>
import jax
import jax.numpy as jnp
from jax.experimental import pallas as pl
from jax.experimental.pallas import tpu as pltpu


def _ffnn_kernel(x_ref, w1_ref, b1_ref, w2_ref, b2_ref, o_ref):
    # x_ref : [tile_r, 128] f32 VMEM   (dense batch-slab tile)
    # w1_ref, b1_ref, w2_ref : [n_hidden] f32 SMEM ; b2_ref : [1] f32 SMEM
    # o_ref : [tile_r, 128] f32 VMEM
    x = x_ref[...]
    n_hidden = w1_ref.shape[0]                    # static (10)
    acc = jnp.zeros_like(x)
    for k in range(n_hidden):                     # static unroll over hidden units
        acc = acc + w2_ref[k] * jnp.tanh(x * w1_ref[k] + b1_ref[k])
    o_ref[...] = (acc + b2_ref[0]).astype(o_ref.dtype)


def simple_ffnn_forward(x, w1, b1, w2, b2, *, n_input=1, max_tile_r=1024):
    """Forward pass of SimpleFFNN (specialized to n_input == 1, n_output == 1).

    x  : [batch, n_input] (or reshapeable to [batch, -1] when n_input == 1)
    w1 : [n_hidden, n_input]   (PyTorch Linear weight layout)
    b1 : [n_hidden]
    w2 : [n_output, n_hidden]
    b2 : [n_output]
    Returns [batch, n_output].
    """
    if n_input == 1:
        x = x.reshape(x.shape[0], -1)

    batch, feat = x.shape
    n_hidden, w_in = w1.shape
    n_output = w2.shape[0]

    assert feat == w_in, f"flattened feature width {feat} != w1 in_features {w_in}"
    # TODO(synk): general n_input > 1 / n_output > 1 needs an MXU matmul path;
    # this kernel implements the module's default degenerate (K=1, N=1) shapes.
    assert w_in == 1 and n_output == 1, "kernel specialized to n_input=1, n_output=1"

    lanes = 128
    x_flat = x.reshape(-1)                             # [batch]
    b_pad = pl.cdiv(batch, lanes) * lanes
    if b_pad != batch:
        # Only the (<128-element) lane remainder is padded; any batch that is a
        # multiple of 128 takes the zero-copy reshape path (no extra HBM pass).
        x_flat = jnp.pad(x_flat, (0, b_pad - batch))
    rows = b_pad // lanes
    x_slab = x_flat.reshape(rows, lanes)               # dense [R, 128] slab

    # Row tile: big blocks (few grid steps), 8-sublane aligned when tiled,
    # >= 2 steps for medium/large problems so v7x's 2 TCs both get work,
    # capped at (1024, 128) f32 = 512 KiB per block (VMEM-safe on v7x's 64 MiB).
    if rows <= 8:
        tile_r = rows                                  # full-dim block (tiny problems)
    else:
        tile_r = max(8, min(max_tile_r, ((rows + 1) // 2) // 8 * 8))
    grid = (pl.cdiv(rows, tile_r),)                    # ragged last block is masked

    # Weights / biases as flat f32 scalars in SMEM (read with scalar indexing).
    w1_s = w1.reshape(-1)                              # [n_hidden]
    b1_s = b1.reshape(-1)                              # [n_hidden]
    w2_s = w2.reshape(-1)                              # [n_hidden]  (n_output == 1)
    b2_s = b2.reshape(-1)                              # [1]

    smem_spec = pl.BlockSpec(memory_space=pltpu.MemorySpace.SMEM)
    cost = pl.CostEstimate(
        flops=4 * n_hidden * b_pad + b_pad,            # mul+add (pre-act) + mul+add (acc)
        transcendentals=n_hidden * b_pad,              # one tanh per hidden unit per elem
        bytes_accessed=2 * 4 * b_pad + 4 * (3 * n_hidden + 1),
    )

    out_slab = pl.pallas_call(
        _ffnn_kernel,
        out_shape=jax.ShapeDtypeStruct((rows, lanes), x.dtype),
        grid=grid,
        in_specs=[
            pl.BlockSpec((tile_r, lanes), lambda i: (i, 0)),   # x slab tile (pipelined)
            smem_spec,                                         # w1 (resident SMEM scalars)
            smem_spec,                                         # b1
            smem_spec,                                         # w2
            smem_spec,                                         # b2
        ],
        out_specs=pl.BlockSpec((tile_r, lanes), lambda i: (i, 0)),
        compiler_params=pltpu.CompilerParams(
            dimension_semantics=("parallel",),                 # shard batch on v7x's 2 TCs
            vmem_limit_bytes=32 << 20,                         # safe on v5e/v6e/v7x
        ),
        cost_estimate=cost,
    )(x_slab, w1_s, b1_s, w2_s, b2_s)

    return out_slab.reshape(-1)[:batch].reshape(batch, n_output)


def init_params(key, n_input=1, n_output=1, n_hidden=10, dtype=jnp.float32):
    """Deterministic init mimicking torch.nn.Linear (uniform +/- 1/sqrt(fan_in))."""
    k1, k2, k3, k4 = jax.random.split(key, 4)
    bound1 = 1.0 / (n_input ** 0.5)
    bound2 = 1.0 / (n_hidden ** 0.5)
    w1 = jax.random.uniform(k1, (n_hidden, n_input), dtype, -bound1, bound1)
    b1 = jax.random.uniform(k2, (n_hidden,), dtype, -bound1, bound1)
    w2 = jax.random.uniform(k3, (n_output, n_hidden), dtype, -bound2, bound2)
    b2 = jax.random.uniform(k4, (n_output,), dtype, -bound2, bound2)
    return w1, b1, w2, b2


if __name__ == "__main__":
    N_INPUT, N_OUTPUT, N_HIDDEN = 1, 1, 10

    key = jax.random.PRNGKey(0)
    pkey, xkey = jax.random.split(key)
    w1, b1, w2, b2 = init_params(pkey, N_INPUT, N_OUTPUT, N_HIDDEN)

    # batch=512  -> single full-dim (4,128) block (clean slab, no pad)
    # batch=2560 -> (8,128) blocks, 3 grid steps, ragged last row-block (masked store)
    for batch in (512, 2560):
        x = jax.random.normal(jax.random.fold_in(xkey, batch),
                              (batch, N_INPUT), dtype=jnp.float32)
        out = jax.block_until_ready(
            simple_ffnn_forward(x, w1, b1, w2, b2, n_input=N_INPUT))

        # Pure-JAX reference of the same math.
        ref = jnp.tanh(x.reshape(batch, -1) @ w1.T + b1) @ w2.T + b2
        assert out.shape == (batch, N_OUTPUT)
        assert jnp.allclose(out, ref, atol=1e-5, rtol=1e-5), f"mismatch at batch={batch}"

    print("KERNEL_OK")
</pallas_src>

<mosaic_0001>
module attributes {stable_mosaic.version = 11 : i64} {
  func.func @_ffnn_kernel(%arg0: i32, %arg1: memref<4x128xf32, #tpu.memory_space<vmem>>, %arg2: memref<10xf32, #tpu.memory_space<smem>>, %arg3: memref<10xf32, #tpu.memory_space<smem>>, %arg4: memref<10xf32, #tpu.memory_space<smem>>, %arg5: memref<1xf32, #tpu.memory_space<smem>>, %arg6: memref<4x128xf32, #tpu.memory_space<vmem>>) attributes {dimension_semantics = [#tpu.dimension_semantics<parallel>], iteration_bounds = array<i64: 1>, scalar_prefetch = 0 : i64, scratch_operands = 0 : i64, tpu.core_type = #tpu.core_type<tc>, window_params = [{transform_indices = @transform_0, window_bounds = array<i64: 4, 128>}, {transform_indices = @transform_1, window_bounds = array<i64: 10>}, {transform_indices = @transform_2, window_bounds = array<i64: 10>}, {transform_indices = @transform_3, window_bounds = array<i64: 10>}, {transform_indices = @transform_4, window_bounds = array<i64: 1>}, {transform_indices = @transform_5, window_bounds = array<i64: 4, 128>}]} {
    %c0 = arith.constant 0 : index
    %c0_0 = arith.constant 0 : index
    %0 = vector.load %arg1[%c0, %c0_0] : memref<4x128xf32, #tpu.memory_space<vmem>>, vector<4x128xf32>
    %cst = arith.constant 0.000000e+00 : f32
    %1 = vector.broadcast %cst : f32 to vector<4x128xf32>
    %c0_1 = arith.constant 0 : index
    %2 = memref.load %arg4[%c0_1] : memref<10xf32, #tpu.memory_space<smem>>
    %c0_2 = arith.constant 0 : index
    %3 = memref.load %arg2[%c0_2] : memref<10xf32, #tpu.memory_space<smem>>
    %4 = vector.broadcast %3 : f32 to vector<4x128xf32>
    %5 = arith.mulf %0, %4 : vector<4x128xf32>
    %c0_3 = arith.constant 0 : index
    %6 = memref.load %arg3[%c0_3] : memref<10xf32, #tpu.memory_space<smem>>
    %7 = vector.broadcast %6 : f32 to vector<4x128xf32>
    %8 = arith.addf %5, %7 : vector<4x128xf32>
    %9 = math.tanh %8 : vector<4x128xf32>
    %10 = vector.broadcast %2 : f32 to vector<4x128xf32>
    %11 = arith.mulf %10, %9 : vector<4x128xf32>
    %12 = arith.addf %1, %11 : vector<4x128xf32>
    %c1 = arith.constant 1 : index
    %13 = memref.load %arg4[%c1] : memref<10xf32, #tpu.memory_space<smem>>
    %c1_4 = arith.constant 1 : index
    %14 = memref.load %arg2[%c1_4] : memref<10xf32, #tpu.memory_space<smem>>
    %15 = vector.broadcast %14 : f32 to vector<4x128xf32>
    %16 = arith.mulf %0, %15 : vector<4x128xf32>
    %c1_5 = arith.constant 1 : index
    %17 = memref.load %arg3[%c1_5] : memref<10xf32, #tpu.memory_space<smem>>
    %18 = vector.broadcast %17 : f32 to vector<4x128xf32>
    %19 = arith.addf %16, %18 : vector<4x128xf32>
    %20 = math.tanh %19 : vector<4x128xf32>
    %21 = vector.broadcast %13 : f32 to vector<4x128xf32>
    %22 = arith.mulf %21, %20 : vector<4x128xf32>
    %23 = arith.addf %12, %22 : vector<4x128xf32>
    %c2 = arith.constant 2 : index
    %24 = memref.load %arg4[%c2] : memref<10xf32, #tpu.memory_space<smem>>
    %c2_6 = arith.constant 2 : index
    %25 = memref.load %arg2[%c2_6] : memref<10xf32, #tpu.memory_space<smem>>
    %26 = vector.broadcast %25 : f32 to vector<4x128xf32>
    %27 = arith.mulf %0, %26 : vector<4x128xf32>
    %c2_7 = arith.constant 2 : index
    %28 = memref.load %arg3[%c2_7] : memref<10xf32, #tpu.memory_space<smem>>
    %29 = vector.broadcast %28 : f32 to vector<4x128xf32>
    %30 = arith.addf %27, %29 : vector<4x128xf32>
    %31 = math.tanh %30 : vector<4x128xf32>
    %32 = vector.broadcast %24 : f32 to vector<4x128xf32>
    %33 = arith.mulf %32, %31 : vector<4x128xf32>
    %34 = arith.addf %23, %33 : vector<4x128xf32>
    %c3 = arith.constant 3 : index
    %35 = memref.load %arg4[%c3] : memref<10xf32, #tpu.memory_space<smem>>
    %c3_8 = arith.constant 3 : index
    %36 = memref.load %arg2[%c3_8] : memref<10xf32, #tpu.memory_space<smem>>
    %37 = vector.broadcast %36 : f32 to vector<4x128xf32>
    %38 = arith.mulf %0, %37 : vector<4x128xf32>
    %c3_9 = arith.constant 3 : index
    %39 = memref.load %arg3[%c3_9] : memref<10xf32, #tpu.memory_space<smem>>
    %40 = vector.broadcast %39 : f32 to vector<4x128xf32>
    %41 = arith.addf %38, %40 : vector<4x128xf32>
    %42 = math.tanh %41 : vector<4x128xf32>
    %43 = vector.broadcast %35 : f32 to vector<4x128xf32>
    %44 = arith.mulf %43, %42 : vector<4x128xf32>
    %45 = arith.addf %34, %44 : vector<4x128xf32>
    %c4 = arith.constant 4 : index
    %46 = memref.load %arg4[%c4] : memref<10xf32, #tpu.memory_space<smem>>
    %c4_10 = arith.constant 4 : index
    %47 = memref.load %arg2[%c4_10] : memref<10xf32, #tpu.memory_space<smem>>
    %48 = vector.broadcast %47 : f32 to vector<4x128xf32>
    %49 = arith.mulf %0, %48 : vector<4x128xf32>
    %c4_11 = arith.constant 4 : index
    %50 = memref.load %arg3[%c4_11] : memref<10xf32, #tpu.memory_space<smem>>
    %51 = vector.broadcast %50 : f32 to vector<4x128xf32>
    %52 = arith.addf %49, %51 : vector<4x128xf32>
    %53 = math.tanh %52 : vector<4x128xf32>
    %54 = vector.broadcast %46 : f32 to vector<4x128xf32>
    %55 = arith.mulf %54, %53 : vector<4x128xf32>
    %56 = arith.addf %45, %55 : vector<4x128xf32>
    %c5 = arith.constant 5 : index
    %57 = memref.load %arg4[%c5] : memref<10xf32, #tpu.memory_space<smem>>
    %c5_12 = arith.constant 5 : index
    %58 = memref.load %arg2[%c5_12] : memref<10xf32, #tpu.memory_space<smem>>
    %59 = vector.broadcast %58 : f32 to vector<4x128xf32>
    %60 = arith.mulf %0, %59 : vector<4x128xf32>
    %c5_13 = arith.constant 5 : index
    %61 = memref.load %arg3[%c5_13] : memref<10xf32, #tpu.memory_space<smem>>
    %62 = vector.broadcast %61 : f32 to vector<4x128xf32>
    %63 = arith.addf %60, %62 : vector<4x128xf32>
    %64 = math.tanh %63 : vector<4x128xf32>
    %65 = vector.broadcast %57 : f32 to vector<4x128xf32>
    %66 = arith.mulf %65, %64 : vector<4x128xf32>
    %67 = arith.addf %56, %66 : vector<4x128xf32>
    %c6 = arith.constant 6 : index
    %68 = memref.load %arg4[%c6] : memref<10xf32, #tpu.memory_space<smem>>
    %c6_14 = arith.constant 6 : index
    %69 = memref.load %arg2[%c6_14] : memref<10xf32, #tpu.memory_space<smem>>
    %70 = vector.broadcast %69 : f32 to vector<4x128xf32>
    %71 = arith.mulf %0, %70 : vector<4x128xf32>
    %c6_15 = arith.constant 6 : index
    %72 = memref.load %arg3[%c6_15] : memref<10xf32, #tpu.memory_space<smem>>
    %73 = vector.broadcast %72 : f32 to vector<4x128xf32>
    %74 = arith.addf %71, %73 : vector<4x128xf32>
    %75 = math.tanh %74 : vector<4x128xf32>
    %76 = vector.broadcast %68 : f32 to vector<4x128xf32>
    %77 = arith.mulf %76, %75 : vector<4x128xf32>
    %78 = arith.addf %67, %77 : vector<4x128xf32>
    %c7 = arith.constant 7 : index
    %79 = memref.load %arg4[%c7] : memref<10xf32, #tpu.memory_space<smem>>
    %c7_16 = arith.constant 7 : index
    %80 = memref.load %arg2[%c7_16] : memref<10xf32, #tpu.memory_space<smem>>
    %81 = vector.broadcast %80 : f32 to vector<4x128xf32>
    %82 = arith.mulf %0, %81 : vector<4x128xf32>
    %c7_17 = arith.constant 7 : index
    %83 = memref.load %arg3[%c7_17] : memref<10xf32, #tpu.memory_space<smem>>
    %84 = vector.broadcast %83 : f32 to vector<4x128xf32>
    %85 = arith.addf %82, %84 : vector<4x128xf32>
    %86 = math.tanh %85 : vector<4x128xf32>
    %87 = vector.broadcast %79 : f32 to vector<4x128xf32>
    %88 = arith.mulf %87, %86 : vector<4x128xf32>
    %89 = arith.addf %78, %88 : vector<4x128xf32>
    %c8 = arith.constant 8 : index
    %90 = memref.load %arg4[%c8] : memref<10xf32, #tpu.memory_space<smem>>
    %c8_18 = arith.constant 8 : index
    %91 = memref.load %arg2[%c8_18] : memref<10xf32, #tpu.memory_space<smem>>
    %92 = vector.broadcast %91 : f32 to vector<4x128xf32>
    %93 = arith.mulf %0, %92 : vector<4x128xf32>
    %c8_19 = arith.constant 8 : index
    %94 = memref.load %arg3[%c8_19] : memref<10xf32, #tpu.memory_space<smem>>
    %95 = vector.broadcast %94 : f32 to vector<4x128xf32>
    %96 = arith.addf %93, %95 : vector<4x128xf32>
    %97 = math.tanh %96 : vector<4x128xf32>
    %98 = vector.broadcast %90 : f32 to vector<4x128xf32>
    %99 = arith.mulf %98, %97 : vector<4x128xf32>
    %100 = arith.addf %89, %99 : vector<4x128xf32>
    %c9 = arith.constant 9 : index
    %101 = memref.load %arg4[%c9] : memref<10xf32, #tpu.memory_space<smem>>
    %c9_20 = arith.constant 9 : index
    %102 = memref.load %arg2[%c9_20] : memref<10xf32, #tpu.memory_space<smem>>
    %103 = vector.broadcast %102 : f32 to vector<4x128xf32>
    %104 = arith.mulf %0, %103 : vector<4x128xf32>
    %c9_21 = arith.constant 9 : index
    %105 = memref.load %arg3[%c9_21] : memref<10xf32, #tpu.memory_space<smem>>
    %106 = vector.broadcast %105 : f32 to vector<4x128xf32>
    %107 = arith.addf %104, %106 : vector<4x128xf32>
    %108 = math.tanh %107 : vector<4x128xf32>
    %109 = vector.broadcast %101 : f32 to vector<4x128xf32>
    %110 = arith.mulf %109, %108 : vector<4x128xf32>
    %111 = arith.addf %100, %110 : vector<4x128xf32>
    %c0_22 = arith.constant 0 : index
    %112 = memref.load %arg5[%c0_22] : memref<1xf32, #tpu.memory_space<smem>>
    %113 = vector.broadcast %112 : f32 to vector<4x128xf32>
    %114 = arith.addf %111, %113 : vector<4x128xf32>
    %c0_23 = arith.constant 0 : index
    %c0_24 = arith.constant 0 : index
    %115 = vector.load %arg6[%c0_23, %c0_24] : memref<4x128xf32, #tpu.memory_space<vmem>>, vector<4x128xf32>
    tpu.vector_store %arg6[%c0_23, %c0_24], %114 {strides = array<i32>} : memref<4x128xf32, #tpu.memory_space<vmem>>, vector<4x128xf32>,
    return
  }
  func.func @transform_0(%arg0: i32) -> (i32, i32) {
    %c0_i32 = arith.constant 0 : i32
    %c0_i32_0 = arith.constant 0 : i32
    return %arg0, %c0_i32 : i32, i32
  }
  func.func @transform_1(%arg0: i32) -> i32 {
    %c0_i32 = arith.constant 0 : i32
    %c0_i32_0 = arith.constant 0 : i32
    return %c0_i32 : i32
  }
  func.func @transform_2(%arg0: i32) -> i32 {
    %c0_i32 = arith.constant 0 : i32
    %c0_i32_0 = arith.constant 0 : i32
    return %c0_i32 : i32
  }
  func.func @transform_3(%arg0: i32) -> i32 {
    %c0_i32 = arith.constant 0 : i32
    %c0_i32_0 = arith.constant 0 : i32
    return %c0_i32 : i32
  }
  func.func @transform_4(%arg0: i32) -> i32 {
    %c0_i32 = arith.constant 0 : i32
    %c0_i32_0 = arith.constant 0 : i32
    return %c0_i32 : i32
  }
  func.func @transform_5(%arg0: i32) -> (i32, i32) {
    %c0_i32 = arith.constant 0 : i32
    %c0_i32_0 = arith.constant 0 : i32
    return %arg0, %c0_i32 : i32, i32
  }
}

</mosaic_0001>

<llo_original>
// kernel: tpu_custom_call.1
$region0: #{tpu_custom_call.1}
  #allocation0 [shape = 'u32[]', space=smem, size = 0x4, offset = 0x4, fixed_abs, tag = 'smem constant byte address 0x4 - core index']
  #allocation1 [shape = 'u32[72,128]{1,0:T(1,128)}', space=vmem, size = 0x9000, scoped, tag = 'internal scratch']
  #allocation2 [shape = 'f32[1]{0:T(128)S(6)}', space=smem, size = 0x200, scoped, tag = 'scoped memory for tpu_custom_call.1']
  %s0 = inlined_call_operand.hbm [shape: f32[4,128], index: 0, kind: input, shape index: {}]
  %s1 = inlined_call_operand.vmem [shape: f32[10], index: 1, kind: input, shape index: {}]
  %s2 = inlined_call_operand.vmem [shape: f32[10], index: 2, kind: input, shape index: {}]
  %s3 = inlined_call_operand.vmem [shape: f32[10], index: 3, kind: input, shape index: {}]
  %s4 = inlined_call_operand.<no memory space> [shape: f32[1], index: 4, kind: input, shape index: {}]
  %s5 = inlined_call_operand.hbm [shape: f32[4,128], index: 5, kind: output, shape index: {}]
  %s6 = sld [smem:[#allocation0]]
  $region46: #{tpu_custom_call.1} parent=0
    _
  %s8 = ssub.s32 1, %s6
  %s9 = scalar_select 0, %s8, %s6
  %10 = sst [smem:[#allocation2]] %s4
  $region1: #{tpu_custom_call.1} parent=0
    #allocation3 [shape = 'u8[2048]{0}', space=vmem, size = 0x800, scoped, tag = 'input window, operand 0, single buffered']
    #allocation4 [shape = 's32[1]{0}', space=sflag, size = 0x4, scoped, tag = 'scoped memory for tpu_custom_call.1']
    #allocation5 [shape = 's32[1]{0}', space=sflag, size = 0x4, scoped, tag = 'scoped memory for tpu_custom_call.1']
    #allocation6 [shape = 's32[1]{0}', space=sflag, size = 0x4, scoped, tag = 'scoped memory for tpu_custom_call.1']
    #allocation7 [shape = 'u8[512]{0}', space=smem, size = 0x200, scoped, tag = 'input window, operand 1, single buffered']
    #allocation8 [shape = 'u8[512]{0}', space=smem, size = 0x200, scoped, tag = 'input window, operand 2, single buffered']
    #allocation9 [shape = 's32[1]{0}', space=sflag, size = 0x4, scoped, tag = 'scoped memory for tpu_custom_call.1']
    #allocation10 [shape = 'u8[512]{0}', space=smem, size = 0x200, scoped, tag = 'input window, operand 3, single buffered']
    #allocation11 [shape = 'u8[2048]{0}', space=vmem, size = 0x800, scoped, tag = 'output window, operand 0, single buffered']
    %11 = vsyncpa [#allocation4], 0
    %12 = vsyncpa [#allocation6], 0
    %13 = vsyncpa [#allocation9], 0
    %14 = vsyncpa [#allocation5], 0
    // Predicated region
    $region2: #{tpu_custom_call.1} parent=1 // pred_check
      _
    $region3: #{tpu_custom_call.1} parent=1 // pred_check_branch
      %16 = sbr.rel (0) target = $region5
    $region4: #{tpu_custom_call.1} parent=1 // pred_region
      %18 = vsyncadd [#allocation4], 0
      %s20 = sshll.u32 %s0, 4
      %s21 = int_to_ptr.hbm [resolvable:$true] %s20
      %s22 = sshll.u32 [#allocation3], 4
      %s23 = int_to_ptr.vmem [resolvable:$true] %s22
      %25 = dma.hbm_to_vmem [thread:$0]  %s21, 64, %s23, [#allocation4]
    $region5: #{tpu_custom_call.1} parent=1 // pred_fallthru
      _
    // Predicated region
    $region6: #{tpu_custom_call.1} parent=1 // pred_check
      _
    $region7: #{tpu_custom_call.1} parent=1 // pred_check_branch
      %27 = sbr.rel (0) target = $region9
    $region8: #{tpu_custom_call.1} parent=1 // pred_region
      %29 = vsyncadd [#allocation6], 0
      %s31 = sshll.u32 %s1, 4
      %s32 = int_to_ptr.vmem [resolvable:$true] %s31
      %34 = dma.vmem_to_smem %s32, 16, [#allocation7], [#allocation6]
    $region9: #{tpu_custom_call.1} parent=1 // pred_fallthru
      _
    // Predicated region
    $region10: #{tpu_custom_call.1} parent=1 // pred_check
      _
    $region11: #{tpu_custom_call.1} parent=1 // pred_check_branch
      %36 = sbr.rel (0) target = $region13
    $region12: #{tpu_custom_call.1} parent=1 // pred_region
      %38 = vsyncadd [#allocation9], 0
      %s40 = sshll.u32 %s2, 4
      %s41 = int_to_ptr.vmem [resolvable:$true] %s40
      %43 = dma.vmem_to_smem %s41, 16, [#allocation8], [#allocation9]
    $region13: #{tpu_custom_call.1} parent=1 // pred_fallthru
      _
    // Predicated region
    $region14: #{tpu_custom_call.1} parent=1 // pred_check
      _
    $region15: #{tpu_custom_call.1} parent=1 // pred_check_branch
      %45 = sbr.rel (0) target = $region17
    $region16: #{tpu_custom_call.1} parent=1 // pred_region
      %47 = vsyncadd [#allocation9], 0
      %s49 = sshll.u32 %s3, 4
      %s50 = int_to_ptr.vmem [resolvable:$true] %s49
      %52 = dma.vmem_to_smem %s50, 16, [#allocation10], [#allocation9]
    $region17: #{tpu_custom_call.1} parent=1 // pred_fallthru
      _
    // Predicated region
    $region18: #{tpu_custom_call.1} parent=1 // pred_check
      _
    $region19: #{tpu_custom_call.1} parent=1 // pred_check_branch
      %54 = sbr.rel (0) target = $region21
    $region20: #{tpu_custom_call.1} parent=1 // pred_region
      _
    $region21: #{tpu_custom_call.1} parent=1 // pred_fallthru
      _
    // Predicated region
    $region22: #{tpu_custom_call.1} parent=1 // pred_check
      _
    $region23: #{tpu_custom_call.1} parent=1 // pred_check_branch
      %56 = sbr.rel (0) target = $region25
    $region24: #{tpu_custom_call.1} parent=1 // pred_region
      %58 = dma.done [#allocation4], 64
    $region25: #{tpu_custom_call.1} parent=1 // pred_fallthru
      _
    // Predicated region
    $region26: #{tpu_custom_call.1} parent=1 // pred_check
      _
    $region27: #{tpu_custom_call.1} parent=1 // pred_check_branch
      %60 = sbr.rel (0) target = $region29
    $region28: #{tpu_custom_call.1} parent=1 // pred_region
      %62 = dma.done [#allocation6], 16
    $region29: #{tpu_custom_call.1} parent=1 // pred_fallthru
      _
    // Predicated region
    $region30: #{tpu_custom_call.1} parent=1 // pred_check
      _
    $region31: #{tpu_custom_call.1} parent=1 // pred_check_branch
      %64 = sbr.rel (0) target = $region33
    $region32: #{tpu_custom_call.1} parent=1 // pred_region
      %66 = dma.done [#allocation9], 16
    $region33: #{tpu_custom_call.1} parent=1 // pred_fallthru
      _
    // Predicated region
    $region34: #{tpu_custom_call.1} parent=1 // pred_check
      _
    $region35: #{tpu_custom_call.1} parent=1 // pred_check_branch
      %68 = sbr.rel (0) target = $region37
    $region36: #{tpu_custom_call.1} parent=1 // pred_region
      %70 = dma.done [#allocation9], 16
    $region37: #{tpu_custom_call.1} parent=1 // pred_fallthru
      _
    %71 = sfence
    %v72 = vld [vmem:[#allocation3] sm:$0xf]
    %s73 = sld [smem:[#allocation10]]
    %s74 = sld [smem:[#allocation7]]
    %v75 = vstv %s74
    %v76 = vmul.f32 %v72, %v75
    %s77 = sld [smem:[#allocation8]]
    %v78 = vstv %s77
    %v79 = vadd.f32 %v76, %v78
    %v80 = vtanh.pop %v79
    %v81 = vstv %s73
    %v82 = vmul.f32 %v81, %v80
    %v83 = vadd.f32 %v82, 0.0
    %s84 = sld [smem:[#allocation10 + $0x1]]
    %s85 = sld [smem:[#allocation7 + $0x1]]
    %v86 = vstv %s85
    %v87 = vmul.f32 %v72, %v86
    %s88 = sld [smem:[#allocation8 + $0x1]]
    %v89 = vstv %s88
    %v90 = vadd.f32 %v87, %v89
    %v91 = vtanh.pop %v90
    %v92 = vstv %s84
    %v93 = vmul.f32 %v92, %v91
    %v94 = vadd.f32 %v83, %v93
    %s95 = sld [smem:[#allocation10 + $0x2]]
    %s96 = sld [smem:[#allocation7 + $0x2]]
    %v97 = vstv %s96
    %v98 = vmul.f32 %v72, %v97
    %s99 = sld [smem:[#allocation8 + $0x2]]
    %v100 = vstv %s99
    %v101 = vadd.f32 %v98, %v100
    %v102 = vtanh.pop %v101
    %v103 = vstv %s95
    %v104 = vmul.f32 %v103, %v102
    %v105 = vadd.f32 %v94, %v104
    %s106 = sld [smem:[#allocation10 + $0x3]]
    %s107 = sld [smem:[#allocation7 + $0x3]]
    %v108 = vstv %s107
    %v109 = vmul.f32 %v72, %v108
    %s110 = sld [smem:[#allocation8 + $0x3]]
    %v111 = vstv %s110
    %v112 = vadd.f32 %v109, %v111
    %v113 = vtanh.pop %v112
    %v114 = vstv %s106
    %v115 = vmul.f32 %v114, %v113
    %v116 = vadd.f32 %v105, %v115
    %s117 = sld [smem:[#allocation10 + $0x4]]
    %s118 = sld [smem:[#allocation7 + $0x4]]
    %v119 = vstv %s118
    %v120 = vmul.f32 %v72, %v119
    %s121 = sld [smem:[#allocation8 + $0x4]]
    %v122 = vstv %s121
    %v123 = vadd.f32 %v120, %v122
    %v124 = vtanh.pop %v123
    %v125 = vstv %s117
    %v126 = vmul.f32 %v125, %v124
    %v127 = vadd.f32 %v116, %v126
    %s128 = sld [smem:[#allocation10 + $0x5]]
    %s129 = sld [smem:[#allocation7 + $0x5]]
    %v130 = vstv %s129
    %v131 = vmul.f32 %v72, %v130
    %s132 = sld [smem:[#allocation8 + $0x5]]
    %v133 = vstv %s132
    %v134 = vadd.f32 %v131, %v133
    %v135 = vtanh.pop %v134
    %v136 = vstv %s128
    %v137 = vmul.f32 %v136, %v135
    %v138 = vadd.f32 %v127, %v137
    %s139 = sld [smem:[#allocation10 + $0x6]]
    %s140 = sld [smem:[#allocation7 + $0x6]]
    %v141 = vstv %s140
    %v142 = vmul.f32 %v72, %v141
    %s143 = sld [smem:[#allocation8 + $0x6]]
    %v144 = vstv %s143
    %v145 = vadd.f32 %v142, %v144
    %v146 = vtanh.pop %v145
    %v147 = vstv %s139
    %v148 = vmul.f32 %v147, %v146
    %v149 = vadd.f32 %v138, %v148
    %s150 = sld [smem:[#allocation10 + $0x7]]
    %s151 = sld [smem:[#allocation7 + $0x7]]
    %v152 = vstv %s151
    %v153 = vmul.f32 %v72, %v152
    %s154 = sld [smem:[#allocation8 + $0x7]]
    %v155 = vstv %s154
    %v156 = vadd.f32 %v153, %v155
    %v157 = vtanh.pop %v156
    %v158 = vstv %s150
    %v159 = vmul.f32 %v158, %v157
    %v160 = vadd.f32 %v149, %v159
    %s161 = sld [smem:[#allocation10 + $0x8]]
    %s162 = sld [smem:[#allocation7 + $0x8]]
    %v163 = vstv %s162
    %v164 = vmul.f32 %v72, %v163
    %s165 = sld [smem:[#allocation8 + $0x8]]
    %v166 = vstv %s165
    %v167 = vadd.f32 %v164, %v166
    %v168 = vtanh.pop %v167
    %v169 = vstv %s161
    %v170 = vmul.f32 %v169, %v168
    %v171 = vadd.f32 %v160, %v170
    %s172 = sld [smem:[#allocation10 + $0x9]]
    %s173 = sld [smem:[#allocation7 + $0x9]]
    %v174 = vstv %s173
    %v175 = vmul.f32 %v72, %v174
    %s176 = sld [smem:[#allocation8 + $0x9]]
    %v177 = vstv %s176
    %v178 = vadd.f32 %v175, %v177
    %v179 = vtanh.pop %v178
    %v180 = vstv %s172
    %v181 = vmul.f32 %v180, %v179
    %v182 = vadd.f32 %v171, %v181
    %s183 = sld [smem:[#allocation2]]
    %v184 = vstv %s183
    %v185 = vadd.f32 %v182, %v184
    %186 = vst [vmem:[#allocation11] sm:$0xf] %v185
    // Predicated region
    $region38: #{tpu_custom_call.1} parent=1 // pred_check
      _
    $region39: #{tpu_custom_call.1} parent=1 // pred_check_branch
      %188 = sbr.rel (0) target = $region41
    $region40: #{tpu_custom_call.1} parent=1 // pred_region
      %190 = vsyncadd [#allocation5], 0
      %s192 = sshll.u32 [#allocation11], 4
      %s193 = int_to_ptr.vmem [resolvable:$true] %s192
      %s194 = sshll.u32 %s5, 4
      %s195 = int_to_ptr.hbm [resolvable:$true] %s194
      %197 = dma.vmem_to_hbm [thread:$0]  %s193, 64, %s195, [#allocation5]
    $region41: #{tpu_custom_call.1} parent=1 // pred_fallthru
      _
    // Predicated region
    $region42: #{tpu_custom_call.1} parent=1 // pred_check
      _
    $region43: #{tpu_custom_call.1} parent=1 // pred_check_branch
      %199 = sbr.rel (0) target = $region45
    $region44: #{tpu_custom_call.1} parent=1 // pred_region
      %201 = dma.done [#allocation5], 64
    $region45: #{tpu_custom_call.1} parent=1 // pred_fallthru
      _
    %202 = vsyncpa [#allocation4], 1
    %203 = vsyncpa [#allocation5], 1
    %204 = vsyncpa [#allocation6], 1
    %205 = vsyncpa [#allocation9], 1

</llo_original>
